<compile_context>
chip_gen: v7x
topology: tpu7x:2x2x1
jax: 0.10.0
libtpu: 0.0.40
codegen_flags: <defaults>
</compile_context>

<pallas_src>
import jax
import jax.numpy as jnp
from jax.experimental import pallas as pl
from jax.experimental.pallas import tpu as pltpu

_LANES = 128
_MIN_GRID = 4  # target >=4 grid programs (v7x dual-TC sharding + pipelining)


# --------------------------------------------------------------------------- #
# Kernel
# --------------------------------------------------------------------------- #
def _swish_kernel(x_ref, o_ref):
    x = x_ref[...]
    xf = x.astype(jnp.float32)  # no-op for f32; explicit upcast for bf16/fp8
    if jnp.dtype(x_ref.dtype) == jnp.dtype(jnp.float32):
        # Exact sigmoid for f32 (1e-6 parity with the reference).
        y = xf * jax.nn.sigmoid(xf)
    else:
        # Narrow dtypes: approx reciprocal (EUP vrcp) — error << bf16 ULP,
        # avoids the divide-refinement VALU work on v7x's 800 Gelem/s stream.
        y = xf * pl.reciprocal(1.0 + jnp.exp(-xf), approx=True)
    o_ref[...] = y.astype(o_ref.dtype)


def _swish_jnp(x):
    """Reference-identical fallback for tiny / ragged tails (computed in f32)."""
    xf = x.astype(jnp.float32)
    return (xf * jax.nn.sigmoid(xf)).astype(x.dtype)


# --------------------------------------------------------------------------- #
# Blocking heuristics
# --------------------------------------------------------------------------- #
def _block_byte_targets():
    """(target_bytes, floor_bytes) per block, generation-aware."""
    try:
        vmem = int(pltpu.get_tpu_info().vmem_capacity_bytes)
    except Exception:
        vmem = 64 << 20  # conservative (v7x per-TC VMEM)
    # Roofline plateaus by ~2-4 MiB blocks; VMEM/16 keeps 2(in)+2(out)
    # double-buffered blocks well under 1/4 of VMEM on every generation.
    target = int(min(4 << 20, max(2 << 20, vmem // 16)))
    # v7x (64 MiB VMEM, 3.2 TB/s): don't shrink below 2 MiB while chasing
    # grid steps; 1 MiB is already fine on v5e/v6e's lower HBM bandwidth.
    floor = (2 << 20) if vmem <= (64 << 20) else (1 << 20)
    return target, floor


def _pick_width(total, ideal_rows):
    """Widest lane-dense (multiple-of-128) divisor of `total` keeping rows large
    enough: prefer rows >= ideal_rows, then rows >= 8, then any divisor."""
    candidates = (4096, 2048, 1024, 512, 256, _LANES)
    for min_rows in (ideal_rows, 8, 1):
        for w in candidates:
            if total % w == 0 and total // w >= min_rows:
                return w
    return _LANES  # unreachable when total % 128 == 0


def _choose_block_rows(rows, row_bytes, target_bytes, floor_bytes):
    if rows < 8:
        return rows  # tiny array: one full-extent block (always legal)
    tgt = max(8, target_bytes // row_bytes)
    cap = max(8, pl.cdiv(rows, _MIN_GRID))      # keep >= _MIN_GRID programs
    floor = max(8, floor_bytes // row_bytes)    # per-block floor (step overhead)
    br = max(min(tgt, cap), floor)
    br = min(br, rows)
    # Sublane alignment: multiples of 32 cover f32/bf16/int8 tiling; else 8.
    for align in (32, 8):
        a = (br // align) * align
        if a >= 8:
            br = a
            break
    return rows if br >= rows else br


# --------------------------------------------------------------------------- #
# 2-D lane-dense fast path (total % 128 == 0)
# --------------------------------------------------------------------------- #
def _swish_2d(x_flat, donate):
    total = x_flat.shape[0]
    dtype = x_flat.dtype
    itemsize = jnp.dtype(dtype).itemsize

    w = _pick_width(total, ideal_rows=8 * _MIN_GRID)
    rows = total // w
    x2d = x_flat.reshape(rows, w)

    target_bytes, floor_bytes = _block_byte_targets()
    block_rows = _choose_block_rows(rows, w * itemsize, target_bytes, floor_bytes)
    grid = (pl.cdiv(rows, block_rows),)  # ragged edge block is masked, no pad

    block_bytes = block_rows * w * itemsize
    # 2 input + 2 output double-buffered blocks plus scratch margin; capped so
    # we stay well inside v7x's 64 MiB physical VMEM.
    vmem_limit = int(min(48 << 20, max(16 << 20, 4 * block_bytes + (4 << 20))))

    out2d = pl.pallas_call(
        _swish_kernel,
        out_shape=jax.ShapeDtypeStruct((rows, w), dtype),
        grid_spec=pltpu.PrefetchScalarGridSpec(
            num_scalar_prefetch=0,
            grid=grid,
            in_specs=[pl.BlockSpec((block_rows, w), lambda i: (i, 0))],
            out_specs=pl.BlockSpec((block_rows, w), lambda i: (i, 0)),
        ),
        compiler_params=pltpu.CompilerParams(
            dimension_semantics=("parallel",),
            vmem_limit_bytes=vmem_limit,
        ),
        input_output_aliases=({0: 0} if donate else {}),
    )(x2d)
    return out2d.reshape(-1)


# --------------------------------------------------------------------------- #
# Public wrapper (matches Swish_Module.forward)
# --------------------------------------------------------------------------- #
def swish_pallas(x: jax.Array, *, donate_input: bool = False) -> jax.Array:
    """Elementwise Swish / SiLU: x * sigmoid(x)."""
    orig_shape = x.shape
    total = x.size
    if total == 0:
        return x

    x_flat = x.reshape(-1)
    aligned = (total // _LANES) * _LANES

    if aligned == total:
        out_flat = _swish_2d(x_flat, donate_input)
    elif aligned == 0:
        # Fewer than 128 elements: not worth a kernel launch.
        out_flat = _swish_jnp(x_flat)
    else:
        # Ragged: 128-aligned prefix through the kernel, tiny tail in plain JAX.
        head = _swish_2d(x_flat[:aligned], False)
        tail = _swish_jnp(x_flat[aligned:])
        out_flat = jnp.concatenate([head, tail])

    return out_flat.reshape(orig_shape)


# TODO(synk): custom backward (Swish.backward) is not implemented; forward only.


if __name__ == "__main__":
    key = jax.random.PRNGKey(0)

    # NCHW input, consistent with the module's use inside a conv net.
    x = jax.random.normal(key, (2, 4, 16, 16), dtype=jnp.float32)
    y = swish_pallas(x)
    jax.block_until_ready(y)
    y_ref = x * jax.nn.sigmoid(x)
    assert y.shape == x.shape and y.dtype == x.dtype
    assert jnp.allclose(y, y_ref, atol=1e-6, rtol=1e-6)

    # Ragged element count (not a multiple of 128) exercises the prefix+tail path.
    x2 = jax.random.normal(jax.random.PRNGKey(0), (3, 5, 7, 11), dtype=jnp.float32)
    y2 = swish_pallas(x2)
    jax.block_until_ready(y2)
    assert jnp.allclose(y2, x2 * jax.nn.sigmoid(x2), atol=1e-6, rtol=1e-6)

    # bf16 path (upcast-to-f32 + approx reciprocal inside the kernel).
    x3 = jax.random.normal(jax.random.PRNGKey(0), (2, 4, 16, 16), dtype=jnp.bfloat16)
    y3 = swish_pallas(x3)
    jax.block_until_ready(y3)
    ref3 = (x3.astype(jnp.float32) * jax.nn.sigmoid(x3.astype(jnp.float32))).astype(jnp.bfloat16)
    assert y3.dtype == jnp.bfloat16
    assert jnp.allclose(y3.astype(jnp.float32), ref3.astype(jnp.float32), atol=1e-2, rtol=1e-2)

    print("KERNEL_OK")
</pallas_src>

<mosaic_0001>
module attributes {stable_mosaic.version = 11 : i64} {
  func.func @_swish_kernel(%arg0: i32, %arg1: memref<8x256xf32, #tpu.memory_space<vmem>>, %arg2: memref<8x256xf32, #tpu.memory_space<vmem>>) attributes {dimension_semantics = [#tpu.dimension_semantics<parallel>], iteration_bounds = array<i64: 1>, scalar_prefetch = 0 : i64, scratch_operands = 0 : i64, tpu.core_type = #tpu.core_type<tc>, window_params = [{transform_indices = @transform_0, window_bounds = array<i64: 8, 256>}, {transform_indices = @transform_1, window_bounds = array<i64: 8, 256>}]} {
    %c0 = arith.constant 0 : index
    %c0_0 = arith.constant 0 : index
    %0 = vector.load %arg1[%c0, %c0_0] : memref<8x256xf32, #tpu.memory_space<vmem>>, vector<8x256xf32>
    %1 = arith.negf %0 : vector<8x256xf32>
    %2 = math.exp %1 : vector<8x256xf32>
    %cst = arith.constant 1.000000e+00 : f32
    %3 = vector.broadcast %cst : f32 to vector<8x256xf32>
    %4 = arith.addf %3, %2 : vector<8x256xf32>
    %5 = arith.divf %3, %4 : vector<8x256xf32>
    %6 = arith.mulf %0, %5 : vector<8x256xf32>
    %c0_1 = arith.constant 0 : index
    %c0_2 = arith.constant 0 : index
    %7 = vector.load %arg2[%c0_1, %c0_2] : memref<8x256xf32, #tpu.memory_space<vmem>>, vector<8x256xf32>
    tpu.vector_store %arg2[%c0_1, %c0_2], %6 {strides = array<i32>} : memref<8x256xf32, #tpu.memory_space<vmem>>, vector<8x256xf32>,
    return
  }
  func.func @transform_0(%arg0: i32) -> (i32, i32) {
    %c0_i32 = arith.constant 0 : i32
    %c0_i32_0 = arith.constant 0 : i32
    return %arg0, %c0_i32 : i32, i32
  }
  func.func @transform_1(%arg0: i32) -> (i32, i32) {
    %c0_i32 = arith.constant 0 : i32
    %c0_i32_0 = arith.constant 0 : i32
    return %arg0, %c0_i32 : i32, i32
  }
}

</mosaic_0001>

<llo_original>
// kernel: tpu_custom_call.1
$region0: #{tpu_custom_call.1}
  #allocation0 [shape = 'u32[]', space=smem, size = 0x4, offset = 0x4, fixed_abs, tag = 'smem constant byte address 0x4 - core index']
  #allocation1 [shape = 'u32[144,128]{1,0:T(1,128)}', space=vmem, size = 0x12000, scoped, tag = 'internal scratch']
  %s0 = inlined_call_operand.hbm [shape: f32[8,256], index: 0, kind: input, shape index: {}]
  %s1 = inlined_call_operand.hbm [shape: f32[8,256], index: 1, kind: output, shape index: {}]
  %s2 = sld [smem:[#allocation0]]
  $region18: #{tpu_custom_call.1} parent=0
    _
  %s4 = ssub.s32 1, %s2
  %s5 = scalar_select 0, %s4, %s2
  $region1: #{tpu_custom_call.1} parent=0
    #allocation2 [shape = 'u8[8192]{0}', space=vmem, size = 0x2000, scoped, tag = 'input window, operand 0, single buffered']
    #allocation3 [shape = 's32[1]{0}', space=sflag, size = 0x4, scoped, tag = 'scoped memory for tpu_custom_call.1']
    #allocation4 [shape = 's32[1]{0}', space=sflag, size = 0x4, scoped, tag = 'scoped memory for tpu_custom_call.1']
    #allocation5 [shape = 'u8[8192]{0}', space=vmem, size = 0x2000, scoped, tag = 'output window, operand 0, single buffered']
    %6 = vsyncpa [#allocation3], 0
    %7 = vsyncpa [#allocation4], 0
    // Predicated region
    $region2: #{tpu_custom_call.1} parent=1 // pred_check
      _
    $region3: #{tpu_custom_call.1} parent=1 // pred_check_branch
      %9 = sbr.rel (0) target = $region5
    $region4: #{tpu_custom_call.1} parent=1 // pred_region
      %s11 = ssub.s32 256, 256
      %12 = vsyncadd [#allocation3], %s11
      %s14 = sshll.u32 [#allocation2], 4
      %s15 = int_to_ptr.vmem [resolvable:$true] %s14
      %17 = dma.hbm_to_vmem [thread:$0]  %s0, 256, %s15, [#allocation3]
    $region5: #{tpu_custom_call.1} parent=1 // pred_fallthru
      _
    // Predicated region
    $region6: #{tpu_custom_call.1} parent=1 // pred_check
      _
    $region7: #{tpu_custom_call.1} parent=1 // pred_check_branch
      %19 = sbr.rel (0) target = $region9
    $region8: #{tpu_custom_call.1} parent=1 // pred_region
      %20 = dma.done [#allocation3], 256
    $region9: #{tpu_custom_call.1} parent=1 // pred_fallthru
      _
    %v21 = vld [vmem:[#allocation2] sm:$0xff]
    %v22 = vld [vmem:[#allocation2 + $0x8] sm:$0xff]
    %v23 = vxor.u32 %v21, 2147483648
    %v24 = vxor.u32 %v22, 2147483648
    %v25 = vmul.f32 %v23, 1.442695
    %v26 = vpow.pop %v25
    %v27 = vmul.f32 %v24, 1.442695
    %v28 = vpow.pop %v27
    %v29 = vadd.f32 %v26, 1.0
    %v30 = vadd.f32 %v28, 1.0
    %v31 = vrcp.pop %v29
    %v32 = vmul.f32 1.0, %v31
    %v33 = vrcp.pop %v30
    %v34 = vmul.f32 1.0, %v33
    %v35 = vmul.f32 %v21, %v32
    %v36 = vmul.f32 %v22, %v34
    %37 = vst [vmem:[#allocation5] sm:$0xff] %v35
    %38 = vst [vmem:[#allocation5 + $0x8] sm:$0xff] %v36
    // Predicated region
    $region10: #{tpu_custom_call.1} parent=1 // pred_check
      _
    $region11: #{tpu_custom_call.1} parent=1 // pred_check_branch
      %40 = sbr.rel (0) target = $region13
    $region12: #{tpu_custom_call.1} parent=1 // pred_region
      %s42 = ssub.s32 256, 256
      %43 = vsyncadd [#allocation4], %s42
      %s45 = sshll.u32 [#allocation5], 4
      %s46 = int_to_ptr.vmem [resolvable:$true] %s45
      %48 = dma.vmem_to_hbm [thread:$0]  %s46, 256, %s1, [#allocation4]
    $region13: #{tpu_custom_call.1} parent=1 // pred_fallthru
      _
    // Predicated region
    $region14: #{tpu_custom_call.1} parent=1 // pred_check
      _
    $region15: #{tpu_custom_call.1} parent=1 // pred_check_branch
      %50 = sbr.rel (0) target = $region17
    $region16: #{tpu_custom_call.1} parent=1 // pred_region
      %51 = dma.done [#allocation4], 256
    $region17: #{tpu_custom_call.1} parent=1 // pred_fallthru
      _
    %52 = vsyncpa [#allocation3], 1
    %53 = vsyncpa [#allocation4], 1

</llo_original>
